<compile_context>
chip_gen: v6e
topology: v6e:2x2x1
jax: 0.10.0
libtpu: 0.0.40
codegen_flags: <defaults>
</compile_context>

<pallas_src>
import jax
import jax.numpy as jnp
from jax.experimental import pallas as pl
from jax.experimental.pallas import tpu as pltpu

# Keep each input block <= 2 MiB so double-buffered input + output comfortably
# fits the default scoped-VMEM limit on v5e/v6e/v7x without explicit tuning.
_MAX_BLOCK_BYTES = 2 * 1024 * 1024


def _gmp_channels_last_kernel(x_ref, o_ref):
    # x_ref: (1, T_TILE, C), o_ref: (1, 1, C). Running max over the T grid axis.
    tile_max = jnp.max(x_ref[...], axis=1, keepdims=True)  # (1, 1, C)

    @pl.when(pl.program_id(1) == 0)
    def _init():
        o_ref[...] = tile_max

    @pl.when(pl.program_id(1) > 0)
    def _acc():
        o_ref[...] = jnp.maximum(o_ref[...], tile_max)


def _gmp_channels_first_kernel(x_ref, o_ref):
    # x_ref: (1, C, T_TILE), o_ref: (1, C, 1). Running max over the T grid axis.
    tile_max = jnp.max(x_ref[...], axis=2, keepdims=True)  # (1, C, 1)

    @pl.when(pl.program_id(1) == 0)
    def _init():
        o_ref[...] = tile_max

    @pl.when(pl.program_id(1) > 0)
    def _acc():
        o_ref[...] = jnp.maximum(o_ref[...], tile_max)


def _pick_time_tile(T, multiple, max_tile):
    """Largest tile <= max_tile that is a multiple of `multiple` and divides T.

    Falls back to the full extent T (always a legal block dim) if none divides.
    """
    if T <= max_tile:
        return T
    cand = (max_tile // multiple) * multiple
    while cand >= multiple:
        if T % cand == 0:
            return cand
        cand -= multiple
    return T


def global_max_pool_1d(x, data_format="channels_last", t_tile=None):
    """GlobalMaxPooling1D: max over the time axis of a 3-D tensor -> (B, C)."""
    assert x.ndim == 3, "GlobalMaxPooling1D expects a 3-D input"
    B = x.shape[0]
    itemsize = jnp.dtype(x.dtype).itemsize

    if data_format == "channels_last":
        _, T, C = x.shape
        # Sublane multiple depends on packing: 8 (f32), 16 (bf16), 32 (int8).
        sub_mult = 8 * max(1, 4 // itemsize)
        if t_tile is None:
            max_rows = max(sub_mult, _MAX_BLOCK_BYTES // max(1, C * itemsize))
            t_tile = _pick_time_tile(T, sub_mult, min(512, max_rows))
        tt = int(t_tile)
        assert T % tt == 0, "time tile must divide T"
        out3 = pl.pallas_call(
            _gmp_channels_last_kernel,
            out_shape=jax.ShapeDtypeStruct((B, 1, C), x.dtype),
            grid_spec=pltpu.PrefetchScalarGridSpec(
                num_scalar_prefetch=0,
                grid=(B, T // tt),
                in_specs=[pl.BlockSpec((1, tt, C), lambda b, t: (b, t, 0))],
                out_specs=pl.BlockSpec((1, 1, C), lambda b, t: (b, 0, 0)),
            ),
            compiler_params=pltpu.CompilerParams(
                dimension_semantics=("parallel", "arbitrary")),
        )(x)
        return out3.reshape(B, C)

    elif data_format == "channels_first":
        _, C, T = x.shape
        if t_tile is None:
            max_cols = max(128, _MAX_BLOCK_BYTES // max(1, C * itemsize))
            t_tile = _pick_time_tile(T, 128, min(2048, max_cols))
        tt = int(t_tile)
        assert T % tt == 0, "time tile must divide T"
        out3 = pl.pallas_call(
            _gmp_channels_first_kernel,
            out_shape=jax.ShapeDtypeStruct((B, C, 1), x.dtype),
            grid_spec=pltpu.PrefetchScalarGridSpec(
                num_scalar_prefetch=0,
                grid=(B, T // tt),
                in_specs=[pl.BlockSpec((1, C, tt), lambda b, t: (b, 0, t))],
                out_specs=pl.BlockSpec((1, C, 1), lambda b, t: (b, 0, 0)),
            ),
            compiler_params=pltpu.CompilerParams(
                dimension_semantics=("parallel", "arbitrary")),
        )(x)
        return out3.reshape(B, C)

    else:
        raise ValueError(f"unknown data_format: {data_format!r}")


if __name__ == "__main__":
    key = jax.random.PRNGKey(0)

    # channels_last (module default): x is (B, T, C) -> max over T -> (B, C)
    B, T, C = 2, 64, 8
    x = jax.random.normal(key, (B, T, C), dtype=jnp.float32)

    # Force multiple time tiles (4) to exercise the running-max accumulator.
    out = global_max_pool_1d(x, data_format="channels_last", t_tile=16)
    out = jax.block_until_ready(out)
    ref = jnp.max(x, axis=1)
    assert out.shape == (B, C) and out.dtype == x.dtype
    assert jnp.array_equal(out, ref)

    # bf16 path: stays bf16 end-to-end (no f32 upcast); max is exact.
    x_bf16 = x.astype(jnp.bfloat16)
    out_bf16 = jax.block_until_ready(global_max_pool_1d(x_bf16, t_tile=16))
    assert out_bf16.dtype == jnp.bfloat16
    assert jnp.array_equal(out_bf16, jnp.max(x_bf16, axis=1))

    # channels_first: x is (B, C, T) -> max over T -> (B, C)
    x_cf = jnp.transpose(x, (0, 2, 1))  # (B, C, T)
    out_cf = jax.block_until_ready(
        global_max_pool_1d(x_cf, data_format="channels_first"))
    assert out_cf.shape == (B, C)
    assert jnp.array_equal(out_cf, jnp.max(x_cf, axis=2))

    print("KERNEL_OK")
</pallas_src>

<mosaic_0001>
module attributes {stable_mosaic.version = 11 : i64} {
  func.func @_gmp_channels_last_kernel(%arg0: i32, %arg1: i32, %arg2: memref<1x16x8xf32, #tpu.memory_space<vmem>>, %arg3: memref<1x1x8xf32, #tpu.memory_space<vmem>>) attributes {dimension_semantics = [#tpu.dimension_semantics<parallel>, #tpu.dimension_semantics<arbitrary>], iteration_bounds = array<i64: 2, 4>, scalar_prefetch = 0 : i64, scratch_operands = 0 : i64, tpu.core_type = #tpu.core_type<tc>, window_params = [{transform_indices = @transform_0, window_bounds = array<i64: 1, 16, 8>}, {transform_indices = @transform_1, window_bounds = array<i64: 1, 1, 8>}]} {
    %c0 = arith.constant 0 : index
    %c0_0 = arith.constant 0 : index
    %c0_1 = arith.constant 0 : index
    %0 = vector.load %arg2[%c0, %c0_0, %c0_1] : memref<1x16x8xf32, #tpu.memory_space<vmem>>, vector<1x16x8xf32>
    %cst = arith.constant dense<0xFF800000> : vector<1x8xf32>
    %1 = vector.multi_reduction <maximumf>, %0, %cst [1] : vector<1x16x8xf32> to vector<1x8xf32>
    %2 = vector.shape_cast %1 : vector<1x8xf32> to vector<1x1x8xf32>
    %c0_i32 = arith.constant 0 : i32
    %3 = arith.cmpi eq, %arg1, %c0_i32 : i32
    %4 = arith.extui %3 : i1 to i32
    %c0_i32_2 = arith.constant 0 : i32
    %5 = arith.cmpi ne, %4, %c0_i32_2 : i32
    scf.if %5 {
      %c0_5 = arith.constant 0 : index
      %c0_6 = arith.constant 0 : index
      %c0_7 = arith.constant 0 : index
      %9 = vector.load %arg3[%c0_5, %c0_6, %c0_7] : memref<1x1x8xf32, #tpu.memory_space<vmem>>, vector<1x1x8xf32>
      tpu.vector_store %arg3[%c0_5, %c0_6, %c0_7], %2 {strides = array<i32>} : memref<1x1x8xf32, #tpu.memory_space<vmem>>, vector<1x1x8xf32>,
    } else {
    }
    %c0_i32_3 = arith.constant 0 : i32
    %6 = arith.cmpi sgt, %arg1, %c0_i32_3 : i32
    %7 = arith.extui %6 : i1 to i32
    %c0_i32_4 = arith.constant 0 : i32
    %8 = arith.cmpi ne, %7, %c0_i32_4 : i32
    scf.if %8 {
      %c0_5 = arith.constant 0 : index
      %c0_6 = arith.constant 0 : index
      %c0_7 = arith.constant 0 : index
      %9 = vector.load %arg3[%c0_5, %c0_6, %c0_7] : memref<1x1x8xf32, #tpu.memory_space<vmem>>, vector<1x1x8xf32>
      %10 = arith.maximumf %9, %2 : vector<1x1x8xf32>
      %c0_8 = arith.constant 0 : index
      %c0_9 = arith.constant 0 : index
      %c0_10 = arith.constant 0 : index
      %11 = vector.load %arg3[%c0_8, %c0_9, %c0_10] : memref<1x1x8xf32, #tpu.memory_space<vmem>>, vector<1x1x8xf32>
      tpu.vector_store %arg3[%c0_8, %c0_9, %c0_10], %10 {strides = array<i32>} : memref<1x1x8xf32, #tpu.memory_space<vmem>>, vector<1x1x8xf32>,
    } else {
    }
    return
  }
  func.func @transform_0(%arg0: i32, %arg1: i32) -> (i32, i32, i32) {
    %c0_i32 = arith.constant 0 : i32
    %c0_i32_0 = arith.constant 0 : i32
    return %arg0, %arg1, %c0_i32 : i32, i32, i32
  }
  func.func @transform_1(%arg0: i32, %arg1: i32) -> (i32, i32, i32) {
    %c0_i32 = arith.constant 0 : i32
    %c0_i32_0 = arith.constant 0 : i32
    %c0_i32_1 = arith.constant 0 : i32
    return %arg0, %c0_i32, %c0_i32_0 : i32, i32, i32
  }
}

</mosaic_0001>

<llo_original>
// kernel: tpu_custom_call.1
$region0: #{tpu_custom_call.1}
  #allocation0 [shape = 'u32[]', space=smem, size = 0x4, offset = 0x4, fixed_abs, tag = 'smem constant byte address 0x4 - core index']
  #allocation1 [shape = 'u32[144,128]{1,0:T(1,128)}', space=vmem, size = 0x12000, scoped, tag = 'internal scratch']
  %s0 = inlined_call_operand.vmem [shape: f32[2,64,8], index: 0, kind: input, shape index: {}]
  %s1 = inlined_call_operand.hbm [shape: f32[2,1,8], index: 1, kind: output, shape index: {}]
  %s2 = sld [smem:[#allocation0]]
  $region45: #{tpu_custom_call.1} parent=0
    _
  %s4 = ssub.s32 1, %s2
  %s5 = scalar_select 0, %s4, %s2
  $region1: #{tpu_custom_call.1} parent=0
    #allocation2 [shape = 'u8[1024]{0}', space=vmem, size = 0x400, scoped, tag = 'output window, operand 0']
    #allocation3 [shape = 's32[2]{0}', space=sflag, size = 0x8, scoped, tag = 'scoped memory for tpu_custom_call.1']
    %6 = vsyncpa [#allocation3], 0
    %s7 = scalar_lea.sflag [#allocation3], 1
    %8 = vsyncpa %s7, 0
    loop: start=0, step=1, limit=10
    $region2: #{tpu_custom_call.1} parent=1 // loop_pre_header
      _
    $region3: #{tpu_custom_call.1} parent=1 // loop_header
      %s10 = sphi 0, %s14
      %p11 = scmp.ge.s32.totalorder %s10, 10
      %s17 = sphi 0, %s29
      %s18 = sphi 0, %s25
      %s19 = sphi 0, %s17
      %s20 = sphi 0, %s18
      %s21 = sphi 0, %s19
      %s22 = sphi 0, %s20
      %s34 = sphi 0, %s36
      %s37 = sphi 0, %s34
      %s38 = sphi 0, %s37
      %s54 = sphi 0, %s38
      %s60 = sphi 0, %s62
      %s63 = sphi 0, %s60
      %s64 = sphi 0, %s63
      %s80 = sphi 0, %s64
    $region4: #{tpu_custom_call.1} parent=1 // loop_header_branch
      %13 = sbr.rel (%p11) target = $region8
    $region5: #{tpu_custom_call.1} parent=1 // loop_body
      %s15 = ssub.s32 %s10, 1
      %s16 = ssub.s32 %s10, 2
      %s23 = sadd.s32 1, %s18
      %p24 = scmp.ge.s32.totalorder %s23, 4
      %s25 = scalar_select %p24, 0, %s23
      %s26 = sadd.s32 1, %s17
      %s27 = scalar_select %p24, %s26, %s17
      %p28 = scmp.ge.s32.totalorder %s27, 2
      %s29 = scalar_select %p28, 0, %s27
      %s30 = ssub.s32 %s17, %s29
      %s31 = ssub.s32 %s18, %s25
      %s32 = sor.u32 %s30, %s31
      %p33 = scmp.eq.s32.totalorder %s32, 0
      %s35 = sadd.s32 %s34, 1
      %s36 = scalar_select %p33, %s34, %s35
      %p39 = pneg %p33
      %p40 = scmp.eq.s32.totalorder %s10, 7
      %p41 = por %p39, %p40
      %p42 = scmp.ne.s32.totalorder %s34, %s37
      %p43 = scmp.eq.s32.totalorder %s10, 0
      %p44 = por %p42, %p43
      %p45 = scmp.ne.s32.totalorder %s34, %s37
      %p46 = scmp.eq.s32.totalorder %s15, 7
      %p47 = por %p45, %p46
      %p48 = scmp.ne.s32.totalorder %s37, %s38
      %p49 = scmp.eq.s32.totalorder %s15, 0
      %p50 = por %p48, %p49
      %p51 = scmp.ne.s32.totalorder %s37, %s38
      %p52 = scmp.eq.s32.totalorder %s16, 7
      %p53 = por %p51, %p52
      %p55 = scmp.ne.s32.totalorder %s38, %s54
      %p56 = scmp.eq.s32.totalorder %s16, 0
      %p57 = por %p55, %p56
      %s58 = ssub.s32 %s17, %s29
      %p59 = scmp.eq.s32.totalorder %s58, 0
      %s61 = sadd.s32 %s60, 1
      %s62 = scalar_select %p59, %s60, %s61
      %p65 = pneg %p59
      %p66 = scmp.eq.s32.totalorder %s10, 7
      %p67 = por %p65, %p66
      %p68 = scmp.ne.s32.totalorder %s60, %s63
      %p69 = scmp.eq.s32.totalorder %s10, 0
      %p70 = por %p68, %p69
      %p71 = scmp.ne.s32.totalorder %s60, %s63
      %p72 = scmp.eq.s32.totalorder %s15, 7
      %p73 = por %p71, %p72
      %p74 = scmp.ne.s32.totalorder %s63, %s64
      %p75 = scmp.eq.s32.totalorder %s15, 0
      %p76 = por %p74, %p75
      %p77 = scmp.ne.s32.totalorder %s63, %s64
      %p78 = scmp.eq.s32.totalorder %s16, 7
      %p79 = por %p77, %p78
      %p81 = scmp.ne.s32.totalorder %s64, %s80
      %p82 = scmp.eq.s32.totalorder %s16, 0
      %p83 = por %p81, %p82
      %p84 = scmp.le.s32.totalorder 1, %s10
      %p85 = scmp.lt.s32.totalorder %s10, 9
      %p86 = pnand %p84, %p85
      %p87 = pneg %p86
      // Predicated region
      $region9: #{tpu_custom_call.1} parent=5 // pred_check
        _
      $region10: #{tpu_custom_call.1} parent=5 // pred_check_branch
        %89 = sbr.rel (%p86) target = $region12
      $region11: #{tpu_custom_call.1} parent=5 // pred_region
        %s90 = ssub.s32 %s10, 1
      $region12: #{tpu_custom_call.1} parent=5 // pred_fallthru
        _
      %p91 = scmp.lt.s32.totalorder %s10, 8
      // Predicated region
      $region13: #{tpu_custom_call.1} parent=5 // pred_check
        %p92 = pneg %p91
      $region14: #{tpu_custom_call.1} parent=5 // pred_check_branch
        %94 = sbr.rel (%p92) target = $region16
      $region15: #{tpu_custom_call.1} parent=5 // pred_region
        // Predicated region
        $region17: #{tpu_custom_call.1} parent=15 // pred_check
          %p95 = pneg %p44
        $region18: #{tpu_custom_call.1} parent=15 // pred_check_branch
          %97 = sbr.rel (%p95) target = $region20
        $region19: #{tpu_custom_call.1} parent=15 // pred_region
          %s98 = smul.u32 2, %s18
          %p99 = scmp.lt.s32.totalorder %s17, 1
          %s100 = scalar_select %p99, %s17, 1
          %p101 = scmp.lt.s32.totalorder %s98, 7
          %s102 = scalar_select %p101, %s98, 7
          %s103 = smul.addr %s100, 8
          %s104 = sadd.s32 %s102, %s103
          %s105 = smul.addr %s104, 8
          %s106 = scalar_lea.vmem %s0, %s105
          %s107 = smul.u32 2, %s18
        $region20: #{tpu_custom_call.1} parent=15 // pred_fallthru
          _
      $region16: #{tpu_custom_call.1} parent=5 // pred_fallthru
        _
      %p108 = scmp.le.s32.totalorder 1, %s10
      %p109 = scmp.lt.s32.totalorder %s10, 9
      %p110 = pnand %p108, %p109
      %p111 = pneg %p110
      // Predicated region
      $region21: #{tpu_custom_call.1} parent=5 // pred_check
        _
      $region22: #{tpu_custom_call.1} parent=5 // pred_check_branch
        %113 = sbr.rel (%p110) target = $region24
      $region23: #{tpu_custom_call.1} parent=5 // pred_region
        %s114 = ssub.s32 %s10, 1
        %s115 = smul.u32 2, %s20
        %p116 = scmp.lt.s32.totalorder %s19, 1
        %s117 = scalar_select %p116, %s19, 1
        %p118 = scmp.lt.s32.totalorder %s115, 7
        %s119 = scalar_select %p118, %s115, 7
        %s120 = smul.addr %s117, 8
        %s121 = sadd.s32 %s119, %s120
        %s122 = smul.addr %s121, 8
        %s123 = scalar_lea.vmem %s0, %s122
        %p124 = pneg %p50
        %p125 = pneg %p47
        %p126 = pneg %p76
        %p127 = pneg %p73
        %s128 = sand.u32 %s63, 1
        %s129 = scalar_lea.sflag [#allocation3], %s128
        %s130 = sand.u32 %s63, 1
        %s131 = scalar_lea.vmem [#allocation2], %s130
        %s132 = smul.u32 2, %s20
        %p133 = scmp.lt.s32.totalorder %s19, 1
        %s134 = scalar_select %p133, %s19, 1
        %p135 = scmp.lt.s32.totalorder %s132, 7
        %s136 = scalar_select %p135, %s132, 7
        %s137 = smul.addr %s134, 8
        %s138 = sadd.s32 %s136, %s137
        %s139 = smul.addr %s138, 8
        %s140 = scalar_lea.vmem %s0, %s139
        %s141 = smul.u32 2, %s20
        %v142 = vld [vmem:[%s140] sm:$0xff]
        %v143 = vld [vmem:[%s140 + $0x8] sm:$0xff]
        %vm144 = vcmask 64512
        %v145 = vsel %vm144, %v142, -inf
        %v146 = vsel %vm144, %v143, -inf
        %v147 = vmax.f32 %v145, %v146
        %v148 = vrot.slane %v147, 4
        %v149 = vmax.f32 %v147, %v148
        %v150 = vrot.slane %v149, 2
        %v151 = vmax.f32 %v149, %v150
        %v152 = vrot.slane %v151, 1
        %v153 = vmax.f32 %v151, %v152
        %p154 = scmp.eq.s32.totalorder %s20, 0
        // Predicated region
        $region25: #{tpu_custom_call.1} parent=23 // pred_check
          %p155 = pneg %p154
        $region26: #{tpu_custom_call.1} parent=23 // pred_check_branch
          %157 = sbr.rel (%p155) target = $region28
        $region27: #{tpu_custom_call.1} parent=23 // pred_region
          %vm158 = vcmask 57344
          %159 = vst.msk [vmem:[%s131] sm:$0x1] %vm158, %v153
        $region28: #{tpu_custom_call.1} parent=23 // pred_fallthru
          _
        %p160 = scmp.gt.s32.totalorder %s20, 0
        // Predicated region
        $region29: #{tpu_custom_call.1} parent=23 // pred_check
          %p161 = pneg %p160
        $region30: #{tpu_custom_call.1} parent=23 // pred_check_branch
          %163 = sbr.rel (%p161) target = $region32
        $region31: #{tpu_custom_call.1} parent=23 // pred_region
          %v164 = vld [vmem:[%s131] sm:$0x1]
          %v165 = vmax.f32 %v164, %v153
          %vm166 = vcmask 57344
          %167 = vst.msk [vmem:[%s131] sm:$0x1] %vm166, %v165
        $region32: #{tpu_custom_call.1} parent=23 // pred_fallthru
          _
        %s168 = sand.u32 %s63, 1
        %s169 = scalar_lea.sflag [#allocation3], %s168
        %s170 = sand.u32 %s63, 1
        %s171 = scalar_lea.vmem [#allocation2], %s170
        // Predicated region
        $region33: #{tpu_custom_call.1} parent=23 // pred_check
          %p172 = pneg %p73
        $region34: #{tpu_custom_call.1} parent=23 // pred_check_branch
          %174 = sbr.rel (%p172) target = $region36
        $region35: #{tpu_custom_call.1} parent=23 // pred_region
          %s176 = ssub.s32 16, 16
          %177 = vsyncadd %s169, %s176
          %s178 = smul.addr %s19, 16
          %s179 = scalar_lea.hbm %s1, %s178
          %s181 = sshll.u32 %s171, 4
          %s182 = int_to_ptr.vmem [resolvable:$true] %s181
          %184 = dma.vmem_to_hbm [thread:$0]  %s182, 16, %s179, %s169
        $region36: #{tpu_custom_call.1} parent=23 // pred_fallthru
          _
      $region24: #{tpu_custom_call.1} parent=5 // pred_fallthru
        _
      %p185 = scmp.le.s32.totalorder 2, %s10
      // Predicated region
      $region37: #{tpu_custom_call.1} parent=5 // pred_check
        %p186 = pneg %p185
      $region38: #{tpu_custom_call.1} parent=5 // pred_check_branch
        %188 = sbr.rel (%p186) target = $region40
      $region39: #{tpu_custom_call.1} parent=5 // pred_region
        %s189 = ssub.s32 %s10, 2
        // Predicated region
        $region41: #{tpu_custom_call.1} parent=39 // pred_check
          %p190 = pneg %p79
        $region42: #{tpu_custom_call.1} parent=39 // pred_check_branch
          %192 = sbr.rel (%p190) target = $region44
        $region43: #{tpu_custom_call.1} parent=39 // pred_region
          %s193 = sand.u32 %s64, 1
          %s194 = scalar_lea.sflag [#allocation3], %s193
          %s195 = sand.u32 %s64, 1
          %s196 = scalar_lea.vmem [#allocation2], %s195
          %197 = dma.done %s194, 16
        $region44: #{tpu_custom_call.1} parent=39 // pred_fallthru
          _
      $region40: #{tpu_custom_call.1} parent=5 // pred_fallthru
        _
    $region6: #{tpu_custom_call.1} parent=1 // loop_footer
      %s14 = sadd.s32 1, %s10
    $region7: #{tpu_custom_call.1} parent=1 // loop_footer_branch
      %9 = sbr.rel target = $region3
    $region8: #{tpu_custom_call.1} parent=1 // loop_exit
      _
    %198 = vsyncpa [#allocation3], 1
    %s199 = scalar_lea.sflag [#allocation3], 1
    %200 = vsyncpa %s199, 1

</llo_original>
